<compile_context>
chip_gen: v6e
topology: v6e:2x2x1
jax: 0.10.0
libtpu: 0.0.40
codegen_flags: <defaults>
</compile_context>

<pallas_src>
import functools
import math

import jax
import jax.numpy as jnp
from jax.experimental import pallas as pl
from jax.experimental.pallas import tpu as pltpu


def _proxy_anchor_kernel(x_ref, pt_ref, lbl_ref, cw_ref,
                         pos_log_ref, neg_log_ref,
                         p_acc, n_acc,
                         *, tile_c, mrg, alpha):
    c = pl.program_id(0)          # class-chunk index (parallel axis)
    i = pl.program_id(1)          # batch-tile index  (reduction axis)

    @pl.when(i == 0)
    def _init():
        p_acc[...] = jnp.zeros_like(p_acc)
        n_acc[...] = jnp.zeros_like(n_acc)

    # ---- normalize the X tile (rsqrt + mul; matches x / max(||x||, eps)) ----
    x = x_ref[...].astype(jnp.float32)                       # (TN, Dp)
    sq = jnp.sum(x * x, axis=-1, keepdims=True)              # (TN, 1)
    inv = jax.lax.rsqrt(jnp.maximum(sq, 1e-24))              # eps = 1e-12
    xn = x * inv

    # ---- cosine similarities on the MXU (proxies already normalized/T'd) ---
    cos = jnp.dot(xn, pt_ref[...].astype(jnp.float32),
                  preferred_element_type=jnp.float32)        # (TN, TC)

    # ---- masks built in-kernel from the label column (no one-hot input) ----
    labels = lbl_ref[...]                                    # (TN, 1) int32
    cls = jax.lax.broadcasted_iota(jnp.int32, cos.shape, 1) + c * tile_c
    pos_mask = cls == labels                                 # (TN, TC)
    valid = labels >= 0                                      # padded rows = -1
    neg_mask = jnp.logical_and(jnp.logical_not(pos_mask), valid)

    # ---- single exp family: pos = e^{a*m} * e^{-a*cos}, neg = e^{a*m}/t ----
    t = jnp.exp(-alpha * cos)
    cm = math.exp(alpha * mrg)                               # folded constant
    pos_e = cm * t
    neg_e = cm * (1.0 / t)

    p_acc[...] += jnp.sum(jnp.where(pos_mask, pos_e, 0.0), axis=0,
                          keepdims=True)
    n_acc[...] += jnp.sum(jnp.where(neg_mask, neg_e, 0.0), axis=0,
                          keepdims=True)

    @pl.when(i == pl.num_programs(1) - 1)
    def _finalize():
        cw = cw_ref[...].astype(jnp.float32)                 # (1, TC)
        pos_log_ref[...] = jnp.log(1.0 + cw * p_acc[...])
        neg_log_ref[...] = jnp.log(1.0 + cw * n_acc[...])


def _round_up(x, m):
    return (x + m - 1) // m * m


def proxy_anchor_cls_reweight(X, indices, T, class_weights, proxies,
                              mrg=0.1, alpha=32.0,
                              tile_n=256, tile_c=1024):
    """JAX/Pallas equivalent of ProxyAnchor_cls_reweight.forward.

    X:             (N, D) float embeddings
    indices:       unused (kept for API parity with the PyTorch module)
    T:             (N,)  int class labels
    class_weights: (C,)  float per-class weights
    proxies:       (C, D) float proxy parameters
    """
    del indices  # unused in the reference forward pass
    X = jnp.asarray(X, jnp.float32)
    proxies = jnp.asarray(proxies, jnp.float32)
    T = jnp.asarray(T, jnp.int32)
    cw = jnp.asarray(class_weights, jnp.float32)

    N, D = X.shape
    C, D2 = proxies.shape
    assert D == D2
    eps = 1e-12

    # Hoisted proxy normalization + transpose (tiny C x D op, done once).
    p_norm = jnp.sqrt(jnp.sum(proxies * proxies, axis=-1, keepdims=True))
    pnT = (proxies / jnp.maximum(p_norm, eps)).T             # (D, C)

    # Tile sizes / lane-dense padding.
    tn = min(tile_n, _round_up(N, 8))
    tc = min(tile_c, _round_up(C, 128))
    n_pad = _round_up(N, tn)
    c_pad = _round_up(C, tc)
    d_pad = _round_up(D, 128)

    Xp = jnp.zeros((n_pad, d_pad), jnp.float32).at[:N, :D].set(X)
    Pp = jnp.zeros((d_pad, c_pad), jnp.float32).at[:D, :C].set(pnT)
    lbl = jnp.full((n_pad, 1), -1, jnp.int32).at[:N, 0].set(T)
    cwp = jnp.zeros((1, c_pad), jnp.float32).at[0, :C].set(cw)  # padded cols=0

    grid = (c_pad // tc, n_pad // tn)

    kernel = functools.partial(_proxy_anchor_kernel,
                               tile_c=tc, mrg=float(mrg), alpha=float(alpha))

    pos_logs, neg_logs = pl.pallas_call(
        kernel,
        out_shape=(jax.ShapeDtypeStruct((1, c_pad), jnp.float32),
                   jax.ShapeDtypeStruct((1, c_pad), jnp.float32)),
        grid_spec=pltpu.PrefetchScalarGridSpec(
            num_scalar_prefetch=0,
            grid=grid,
            in_specs=[
                pl.BlockSpec((tn, d_pad), lambda c, i: (i, 0)),   # X tile
                pl.BlockSpec((d_pad, tc), lambda c, i: (0, c)),   # proxies^T
                pl.BlockSpec((tn, 1),     lambda c, i: (i, 0)),   # labels
                pl.BlockSpec((1, tc),     lambda c, i: (0, c)),   # class_w
            ],
            out_specs=[
                pl.BlockSpec((1, tc), lambda c, i: (0, c)),       # pos logs
                pl.BlockSpec((1, tc), lambda c, i: (0, c)),       # neg logs
            ],
            scratch_shapes=[pltpu.VMEM((1, tc), jnp.float32),     # pos acc
                            pltpu.VMEM((1, tc), jnp.float32)],    # neg acc
        ),
        compiler_params=pltpu.CompilerParams(
            dimension_semantics=("parallel", "arbitrary")),
    )(Xp, Pp, lbl, cwp)

    # num_valid_proxies (classes with >=1 positive) computed on N labels only.
    counts = jnp.zeros((C,), jnp.float32).at[T].add(1.0)
    num_valid = jnp.sum((counts > 0).astype(jnp.float32))

    pos_term = jnp.sum(pos_logs) / num_valid
    neg_term = jnp.sum(neg_logs) / float(C)
    # TODO(synk): smoothing_const > 0 label smoothing is not implemented; the
    # reference forward always uses the default smoothing_const = 0 (one-hot).
    return pos_term + neg_term


def _reference_loss(X, T, class_weights, proxies, mrg=0.1, alpha=32.0):
    """Pure-JAX reference used to sanity-check the kernel."""
    eps = 1e-12
    P = proxies / jnp.maximum(
        jnp.linalg.norm(proxies, axis=-1, keepdims=True), eps)
    Xn = X / jnp.maximum(jnp.linalg.norm(X, axis=-1, keepdims=True), eps)
    cos = Xn @ P.T
    nb_classes = proxies.shape[0]
    P_one_hot = jax.nn.one_hot(T, nb_classes, dtype=jnp.float32)
    N_one_hot = 1.0 - P_one_hot
    pos_exp = jnp.exp(-alpha * (cos - mrg))
    neg_exp = jnp.exp(alpha * (cos + mrg))
    num_valid = jnp.sum((P_one_hot.sum(axis=0) != 0).astype(jnp.float32))
    P_sim_sum = jnp.sum(jnp.where(P_one_hot == 1.0, pos_exp, 0.0), axis=0)
    N_sim_sum = jnp.sum(jnp.where(N_one_hot == 1.0, neg_exp, 0.0), axis=0)
    pos_term = jnp.sum(jnp.log(1.0 + class_weights * P_sim_sum)) / num_valid
    neg_term = jnp.sum(jnp.log(1.0 + class_weights * N_sim_sum)) / nb_classes
    return pos_term + neg_term


if __name__ == "__main__":
    # Small deterministic example: batch N=8, classes C=16, embed D=32.
    N, C, D = 8, 16, 32
    key = jax.random.PRNGKey(0)
    kx, kp, kt, kw = jax.random.split(key, 4)

    X = jax.random.normal(kx, (N, D), dtype=jnp.float32)
    proxies = jax.random.normal(kp, (C, D), dtype=jnp.float32)
    T = jax.random.randint(kt, (N,), 0, C, dtype=jnp.int32)
    class_weights = jax.random.uniform(kw, (C,), dtype=jnp.float32) + 0.5
    indices = jnp.arange(N, dtype=jnp.int32)  # unused, kept for API parity

    loss = proxy_anchor_cls_reweight(X, indices, T, class_weights, proxies,
                                     mrg=0.1, alpha=32.0)
    loss = jax.block_until_ready(loss)

    ref = _reference_loss(X, T, class_weights, proxies, mrg=0.1, alpha=32.0)
    assert jnp.allclose(loss, ref, rtol=1e-4, atol=1e-4), (loss, ref)

    print("KERNEL_OK")
</pallas_src>

<mosaic_0001>
module attributes {stable_mosaic.version = 11 : i64} {
  func.func @_proxy_anchor_kernel(%arg0: i32, %arg1: i32, %arg2: memref<8x128xf32, #tpu.memory_space<vmem>>, %arg3: memref<128x128xf32, #tpu.memory_space<vmem>>, %arg4: memref<8x1xi32, #tpu.memory_space<vmem>>, %arg5: memref<1x128xf32, #tpu.memory_space<vmem>>, %arg6: memref<1x128xf32, #tpu.memory_space<vmem>>, %arg7: memref<1x128xf32, #tpu.memory_space<vmem>>, %arg8: memref<1x128xf32, #tpu.memory_space<vmem>>, %arg9: memref<1x128xf32, #tpu.memory_space<vmem>>) attributes {dimension_semantics = [#tpu.dimension_semantics<parallel>, #tpu.dimension_semantics<arbitrary>], iteration_bounds = array<i64: 1, 1>, scalar_prefetch = 0 : i64, scratch_operands = 2 : i64, tpu.core_type = #tpu.core_type<tc>, window_params = [{transform_indices = @transform_0, window_bounds = array<i64: 8, 128>}, {transform_indices = @transform_1, window_bounds = array<i64: 128, 128>}, {transform_indices = @transform_2, window_bounds = array<i64: 8, 1>}, {transform_indices = @transform_3, window_bounds = array<i64: 1, 128>}, {transform_indices = @transform_4, window_bounds = array<i64: 1, 128>}, {transform_indices = @transform_5, window_bounds = array<i64: 1, 128>}]} {
    %c0_i32 = arith.constant 0 : i32
    %0 = arith.cmpi eq, %arg1, %c0_i32 : i32
    %1 = arith.extui %0 : i1 to i32
    %c0_i32_0 = arith.constant 0 : i32
    %2 = arith.cmpi ne, %1, %c0_i32_0 : i32
    scf.if %2 {
      %cst_28 = arith.constant 0.000000e+00 : f32
      %52 = vector.broadcast %cst_28 : f32 to vector<1x128xf32>
      %c0_29 = arith.constant 0 : index
      %c0_30 = arith.constant 0 : index
      %53 = vector.load %arg8[%c0_29, %c0_30] : memref<1x128xf32, #tpu.memory_space<vmem>>, vector<1x128xf32>
      tpu.vector_store %arg8[%c0_29, %c0_30], %52 {strides = array<i32>} : memref<1x128xf32, #tpu.memory_space<vmem>>, vector<1x128xf32>,
      %cst_31 = arith.constant 0.000000e+00 : f32
      %54 = vector.broadcast %cst_31 : f32 to vector<1x128xf32>
      %c0_32 = arith.constant 0 : index
      %c0_33 = arith.constant 0 : index
      %55 = vector.load %arg9[%c0_32, %c0_33] : memref<1x128xf32, #tpu.memory_space<vmem>>, vector<1x128xf32>
      tpu.vector_store %arg9[%c0_32, %c0_33], %54 {strides = array<i32>} : memref<1x128xf32, #tpu.memory_space<vmem>>, vector<1x128xf32>,
    } else {
    }
    %c0 = arith.constant 0 : index
    %c0_1 = arith.constant 0 : index
    %3 = vector.load %arg2[%c0, %c0_1] : memref<8x128xf32, #tpu.memory_space<vmem>>, vector<8x128xf32>
    %4 = arith.mulf %3, %3 : vector<8x128xf32>
    %cst = arith.constant dense<0.000000e+00> : vector<8xf32>
    %5 = vector.multi_reduction <add>, %4, %cst [1] : vector<8x128xf32> to vector<8xf32>
    %6 = vector.shape_cast %5 : vector<8xf32> to vector<8x1xf32>
    %cst_2 = arith.constant 1.000000e-24 : f32
    %7 = vector.broadcast %cst_2 : f32 to vector<8x1xf32>
    %8 = arith.maximumf %6, %7 : vector<8x1xf32>
    %9 = math.rsqrt %8 : vector<8x1xf32>
    %10 = vector.broadcast %9 : vector<8x1xf32> to vector<8x128xf32>
    %11 = arith.mulf %3, %10 : vector<8x128xf32>
    %c0_3 = arith.constant 0 : index
    %c0_4 = arith.constant 0 : index
    %12 = vector.load %arg3[%c0_3, %c0_4] : memref<128x128xf32, #tpu.memory_space<vmem>>, vector<128x128xf32>
    %cst_5 = arith.constant dense<0.000000e+00> : vector<8x128xf32>
    %13 = tpu.matmul %11, %12, %cst_5 {dimension_numbers = #tpu.dot_dimension_numbers<[1], [0], [0], [1], [0, 0, 1, 1], [], []>} : vector<8x128xf32>, vector<128x128xf32>, vector<8x128xf32> -> vector<8x128xf32>
    %c0_6 = arith.constant 0 : index
    %c0_7 = arith.constant 0 : index
    %14 = vector.load %arg4[%c0_6, %c0_7] : memref<8x1xi32, #tpu.memory_space<vmem>>, vector<8x1xi32>
    %15 = tpu.iota {dimensions = array<i32: 1>} : vector<8x128xi32>
    %c128_i32 = arith.constant 128 : i32
    %16 = arith.muli %arg0, %c128_i32 : i32
    %17 = vector.broadcast %16 : i32 to vector<8x128xi32>
    %18 = arith.addi %15, %17 : vector<8x128xi32>
    %19 = vector.broadcast %14 : vector<8x1xi32> to vector<8x128xi32>
    %20 = arith.cmpi eq, %18, %19 : vector<8x128xi32>
    %c0_i32_8 = arith.constant 0 : i32
    %21 = vector.broadcast %c0_i32_8 : i32 to vector<8x1xi32>
    %22 = arith.cmpi sge, %14, %21 : vector<8x1xi32>
    %cst_9 = arith.constant dense<true> : vector<8x128xi1>
    %23 = arith.xori %20, %cst_9 : vector<8x128xi1>
    %24 = vector.broadcast %22 : vector<8x1xi1> to vector<8x128xi1>
    %25 = arith.andi %23, %24 : vector<8x128xi1>
    %cst_10 = arith.constant -3.200000e+01 : f32
    %26 = vector.broadcast %cst_10 : f32 to vector<8x128xf32>
    %27 = arith.mulf %26, %13 : vector<8x128xf32>
    %28 = math.exp %27 : vector<8x128xf32>
    %cst_11 = arith.constant 24.5325298 : f32
    %29 = vector.broadcast %cst_11 : f32 to vector<8x128xf32>
    %30 = arith.mulf %29, %28 : vector<8x128xf32>
    %cst_12 = arith.constant 1.000000e+00 : f32
    %31 = vector.broadcast %cst_12 : f32 to vector<8x128xf32>
    %32 = arith.divf %31, %28 : vector<8x128xf32>
    %cst_13 = arith.constant 24.5325298 : f32
    %33 = vector.broadcast %cst_13 : f32 to vector<8x128xf32>
    %34 = arith.mulf %33, %32 : vector<8x128xf32>
    %c0_14 = arith.constant 0 : index
    %c0_15 = arith.constant 0 : index
    %35 = vector.load %arg8[%c0_14, %c0_15] : memref<1x128xf32, #tpu.memory_space<vmem>>, vector<1x128xf32>
    %cst_16 = arith.constant 0.000000e+00 : f32
    %36 = vector.broadcast %cst_16 : f32 to vector<8x128xf32>
    %37 = arith.select %20, %30, %36 : vector<8x128xi1>, vector<8x128xf32>
    %cst_17 = arith.constant dense<0.000000e+00> : vector<128xf32>
    %38 = vector.multi_reduction <add>, %37, %cst_17 [0] : vector<8x128xf32> to vector<128xf32>
    %39 = vector.shape_cast %38 : vector<128xf32> to vector<1x128xf32>
    %40 = arith.addf %35, %39 : vector<1x128xf32>
    %c0_18 = arith.constant 0 : index
    %c0_19 = arith.constant 0 : index
    %41 = vector.load %arg8[%c0_18, %c0_19] : memref<1x128xf32, #tpu.memory_space<vmem>>, vector<1x128xf32>
    tpu.vector_store %arg8[%c0_18, %c0_19], %40 {strides = array<i32>} : memref<1x128xf32, #tpu.memory_space<vmem>>, vector<1x128xf32>,
    %c0_20 = arith.constant 0 : index
    %c0_21 = arith.constant 0 : index
    %42 = vector.load %arg9[%c0_20, %c0_21] : memref<1x128xf32, #tpu.memory_space<vmem>>, vector<1x128xf32>
    %cst_22 = arith.constant 0.000000e+00 : f32
    %43 = vector.broadcast %cst_22 : f32 to vector<8x128xf32>
    %44 = arith.select %25, %34, %43 : vector<8x128xi1>, vector<8x128xf32>
    %cst_23 = arith.constant dense<0.000000e+00> : vector<128xf32>
    %45 = vector.multi_reduction <add>, %44, %cst_23 [0] : vector<8x128xf32> to vector<128xf32>
    %46 = vector.shape_cast %45 : vector<128xf32> to vector<1x128xf32>
    %47 = arith.addf %42, %46 : vector<1x128xf32>
    %c0_24 = arith.constant 0 : index
    %c0_25 = arith.constant 0 : index
    %48 = vector.load %arg9[%c0_24, %c0_25] : memref<1x128xf32, #tpu.memory_space<vmem>>, vector<1x128xf32>
    tpu.vector_store %arg9[%c0_24, %c0_25], %47 {strides = array<i32>} : memref<1x128xf32, #tpu.memory_space<vmem>>, vector<1x128xf32>,
    %c0_i32_26 = arith.constant 0 : i32
    %49 = arith.cmpi eq, %arg1, %c0_i32_26 : i32
    %50 = arith.extui %49 : i1 to i32
    %c0_i32_27 = arith.constant 0 : i32
    %51 = arith.cmpi ne, %50, %c0_i32_27 : i32
    scf.if %51 {
      %c0_28 = arith.constant 0 : index
      %c0_29 = arith.constant 0 : index
      %52 = vector.load %arg5[%c0_28, %c0_29] : memref<1x128xf32, #tpu.memory_space<vmem>>, vector<1x128xf32>
      %c0_30 = arith.constant 0 : index
      %c0_31 = arith.constant 0 : index
      %53 = vector.load %arg8[%c0_30, %c0_31] : memref<1x128xf32, #tpu.memory_space<vmem>>, vector<1x128xf32>
      %54 = arith.mulf %52, %53 : vector<1x128xf32>
      %cst_32 = arith.constant 1.000000e+00 : f32
      %55 = vector.broadcast %cst_32 : f32 to vector<1x128xf32>
      %56 = arith.addf %55, %54 : vector<1x128xf32>
      %57 = math.log %56 : vector<1x128xf32>
      %c0_33 = arith.constant 0 : index
      %c0_34 = arith.constant 0 : index
      %58 = vector.load %arg6[%c0_33, %c0_34] : memref<1x128xf32, #tpu.memory_space<vmem>>, vector<1x128xf32>
      tpu.vector_store %arg6[%c0_33, %c0_34], %57 {strides = array<i32>} : memref<1x128xf32, #tpu.memory_space<vmem>>, vector<1x128xf32>,
      %c0_35 = arith.constant 0 : index
      %c0_36 = arith.constant 0 : index
      %59 = vector.load %arg9[%c0_35, %c0_36] : memref<1x128xf32, #tpu.memory_space<vmem>>, vector<1x128xf32>
      %60 = arith.mulf %52, %59 : vector<1x128xf32>
      %cst_37 = arith.constant 1.000000e+00 : f32
      %61 = vector.broadcast %cst_37 : f32 to vector<1x128xf32>
      %62 = arith.addf %61, %60 : vector<1x128xf32>
      %63 = math.log %62 : vector<1x128xf32>
      %c0_38 = arith.constant 0 : index
      %c0_39 = arith.constant 0 : index
      %64 = vector.load %arg7[%c0_38, %c0_39] : memref<1x128xf32, #tpu.memory_space<vmem>>, vector<1x128xf32>
      tpu.vector_store %arg7[%c0_38, %c0_39], %63 {strides = array<i32>} : memref<1x128xf32, #tpu.memory_space<vmem>>, vector<1x128xf32>,
    } else {
    }
    return
  }
  func.func @transform_0(%arg0: i32, %arg1: i32) -> (i32, i32) {
    %c0_i32 = arith.constant 0 : i32
    %c0_i32_0 = arith.constant 0 : i32
    return %arg1, %c0_i32 : i32, i32
  }
  func.func @transform_1(%arg0: i32, %arg1: i32) -> (i32, i32) {
    %c0_i32 = arith.constant 0 : i32
    %c0_i32_0 = arith.constant 0 : i32
    return %c0_i32, %arg0 : i32, i32
  }
  func.func @transform_2(%arg0: i32, %arg1: i32) -> (i32, i32) {
    %c0_i32 = arith.constant 0 : i32
    %c0_i32_0 = arith.constant 0 : i32
    return %arg1, %c0_i32 : i32, i32
  }
  func.func @transform_3(%arg0: i32, %arg1: i32) -> (i32, i32) {
    %c0_i32 = arith.constant 0 : i32
    %c0_i32_0 = arith.constant 0 : i32
    return %c0_i32, %arg0 : i32, i32
  }
  func.func @transform_4(%arg0: i32, %arg1: i32) -> (i32, i32) {
    %c0_i32 = arith.constant 0 : i32
    %c0_i32_0 = arith.constant 0 : i32
    return %c0_i32, %arg0 : i32, i32
  }
  func.func @transform_5(%arg0: i32, %arg1: i32) -> (i32, i32) {
    %c0_i32 = arith.constant 0 : i32
    %c0_i32_0 = arith.constant 0 : i32
    return %c0_i32, %arg0 : i32, i32
  }
}

</mosaic_0001>

<llo_original>
// kernel: tpu_custom_call.1
$region0: #{tpu_custom_call.1}
  #allocation0 [shape = 'u32[]', space=smem, size = 0x4, offset = 0x4, fixed_abs, tag = 'smem constant byte address 0x4 - core index']
  #allocation1 [shape = 'u32[144,128]{1,0:T(1,128)}', space=vmem, size = 0x12000, scoped, tag = 'internal scratch']
  #allocation2 [shape = 'f32[1,128]{1,0:T(1,128)}', space=vmem, size = 0x200, scoped, tag = 'scratch operand']
  #allocation3 [shape = 'f32[1,128]{1,0:T(1,128)}', space=vmem, size = 0x200, scoped, tag = 'scratch operand']
  %s0 = inlined_call_operand.vmem [shape: f32[8,128], index: 0, kind: input, shape index: {}]
  %s1 = inlined_call_operand.hbm [shape: f32[128,128], index: 1, kind: input, shape index: {}]
  %s2 = inlined_call_operand.vmem [shape: s32[8,1], index: 2, kind: input, shape index: {}]
  %s3 = inlined_call_operand.vmem [shape: f32[1,128], index: 3, kind: input, shape index: {}]
  %s4 = inlined_call_operand.hbm [shape: f32[1,128], index: 4, kind: output, shape index: {0}]
  %s5 = inlined_call_operand.hbm [shape: f32[1,128], index: 5, kind: output, shape index: {1}]
  %6 = xla_tuple %s4, %s5
  %s7 = sld [smem:[#allocation0]]
  $region46: #{tpu_custom_call.1} parent=0
    _
  %s9 = ssub.s32 1, %s7
  %s10 = scalar_select 0, %s9, %s7
  $region1: #{tpu_custom_call.1} parent=0
    #allocation4 [shape = 'u8[65536]{0}', space=vmem, size = 0x10000, scoped, tag = 'input window, operand 1, single buffered']
    #allocation5 [shape = 's32[1]{0}', space=sflag, size = 0x4, scoped, tag = 'scoped memory for tpu_custom_call.1']
    #allocation6 [shape = 's32[1]{0}', space=sflag, size = 0x4, scoped, tag = 'scoped memory for tpu_custom_call.1']
    #allocation7 [shape = 'u8[512]{0}', space=vmem, size = 0x400, scoped, tag = 'output window, operand 0, single buffered']
    #allocation8 [shape = 'u8[512]{0}', space=vmem, size = 0x400, scoped, tag = 'output window, operand 1, single buffered']
    #allocation9 [shape = 's32[1]{0}', space=sflag, size = 0x4, scoped, tag = 'scoped memory for tpu_custom_call.1']
    %11 = vsyncpa [#allocation5], 0
    %12 = vsyncpa [#allocation6], 0
    %13 = vsyncpa [#allocation9], 0
    // Predicated region
    $region2: #{tpu_custom_call.1} parent=1 // pred_check
      _
    $region3: #{tpu_custom_call.1} parent=1 // pred_check_branch
      %15 = sbr.rel (0) target = $region5
    $region4: #{tpu_custom_call.1} parent=1 // pred_region
      _
    $region5: #{tpu_custom_call.1} parent=1 // pred_fallthru
      _
    // Predicated region
    $region6: #{tpu_custom_call.1} parent=1 // pred_check
      _
    $region7: #{tpu_custom_call.1} parent=1 // pred_check_branch
      %17 = sbr.rel (0) target = $region9
    $region8: #{tpu_custom_call.1} parent=1 // pred_region
      %s19 = ssub.s32 2048, 2048
      %20 = vsyncadd [#allocation5], %s19
      %s21 = sshll.u32 [#allocation4], 4
      %s22 = int_to_ptr.vmem [resolvable:$true] %s21
      %27 = dma.hbm_to_vmem [thread:$0]  %s1, 2048, %s22, [#allocation5], 128, 128, 8
    $region9: #{tpu_custom_call.1} parent=1 // pred_fallthru
      _
    // Predicated region
    $region10: #{tpu_custom_call.1} parent=1 // pred_check
      _
    $region11: #{tpu_custom_call.1} parent=1 // pred_check_branch
      %29 = sbr.rel (0) target = $region13
    $region12: #{tpu_custom_call.1} parent=1 // pred_region
      _
    $region13: #{tpu_custom_call.1} parent=1 // pred_fallthru
      _
    // Predicated region
    $region14: #{tpu_custom_call.1} parent=1 // pred_check
      _
    $region15: #{tpu_custom_call.1} parent=1 // pred_check_branch
      %31 = sbr.rel (0) target = $region17
    $region16: #{tpu_custom_call.1} parent=1 // pred_region
      _
    $region17: #{tpu_custom_call.1} parent=1 // pred_fallthru
      _
    // Predicated region
    $region18: #{tpu_custom_call.1} parent=1 // pred_check
      _
    $region19: #{tpu_custom_call.1} parent=1 // pred_check_branch
      %33 = sbr.rel (0) target = $region21
    $region20: #{tpu_custom_call.1} parent=1 // pred_region
      %34 = dma.done [#allocation5], 2048
    $region21: #{tpu_custom_call.1} parent=1 // pred_fallthru
      _
    %p35 = scmp.eq.s32.totalorder 0, 0
    // Predicated region
    $region22: #{tpu_custom_call.1} parent=1 // pred_check
      %p36 = pneg %p35
    $region23: #{tpu_custom_call.1} parent=1 // pred_check_branch
      %38 = sbr.rel (%p36) target = $region25
    $region24: #{tpu_custom_call.1} parent=1 // pred_region
      %39 = vst [vmem:[#allocation2] sm:$0x1] 0.0
      %40 = vst [vmem:[#allocation3] sm:$0x1] 0.0
    $region25: #{tpu_custom_call.1} parent=1 // pred_fallthru
      _
    %v41 = vld [vmem:[%s0] sm:$0xff]
    %v42 = vmul.f32 %v41, %v41
    %43 = vadd.xlane.f32.xlu0 %v42
    %v44 = vpop.xlane.xlu0 %43
    %v45 = vmax.f32 %v44, 1e-24
    %v46 = vrsqrt.pop %v45
    %v47 = vmul.f32 %v41, %v46
    %v48 = vld [vmem:[#allocation4] sm:$0xff]
    %v49 = vld [vmem:[#allocation4 + $0x8] sm:$0xff]
    %v50 = vld [vmem:[#allocation4 + $0x10] sm:$0xff]
    %v51 = vld [vmem:[#allocation4 + $0x18] sm:$0xff]
    %v52 = vld [vmem:[#allocation4 + $0x20] sm:$0xff]
    %v53 = vld [vmem:[#allocation4 + $0x28] sm:$0xff]
    %v54 = vld [vmem:[#allocation4 + $0x30] sm:$0xff]
    %v55 = vld [vmem:[#allocation4 + $0x38] sm:$0xff]
    %v56 = vld [vmem:[#allocation4 + $0x40] sm:$0xff]
    %v57 = vld [vmem:[#allocation4 + $0x48] sm:$0xff]
    %v58 = vld [vmem:[#allocation4 + $0x50] sm:$0xff]
    %v59 = vld [vmem:[#allocation4 + $0x58] sm:$0xff]
    %v60 = vld [vmem:[#allocation4 + $0x60] sm:$0xff]
    %v61 = vld [vmem:[#allocation4 + $0x68] sm:$0xff]
    %v62 = vld [vmem:[#allocation4 + $0x70] sm:$0xff]
    %v63 = vld [vmem:[#allocation4 + $0x78] sm:$0xff]
    %64 = vmatprep.subr.mxu0 0.0
    %65 = vmatpush1.msra.mxu0 %v63
    %66 = vmatprep.subr.mxu0 0.0
    %67 = vmatpush1.msra.mxu0 %v62
    %68 = vmatprep.subr.mxu0 0.0
    %69 = vmatpush1.msra.mxu0 %v61
    %70 = vmatprep.subr.mxu0 0.0
    %71 = vmatpush1.msra.mxu0 %v60
    %72 = vmatprep.subr.mxu0 0.0
    %73 = vmatpush1.msra.mxu0 %v59
    %74 = vmatprep.subr.mxu0 0.0
    %75 = vmatpush1.msra.mxu0 %v58
    %76 = vmatprep.subr.mxu0 0.0
    %77 = vmatpush1.msra.mxu0 %v57
    %78 = vmatprep.subr.mxu0 0.0
    %79 = vmatpush1.msra.mxu0 %v56
    %80 = vmatprep.subr.mxu0 0.0
    %81 = vmatpush1.msra.mxu0 %v55
    %82 = vmatprep.subr.mxu0 0.0
    %83 = vmatpush1.msra.mxu0 %v54
    %84 = vmatprep.subr.mxu0 0.0
    %85 = vmatpush1.msra.mxu0 %v53
    %86 = vmatprep.subr.mxu0 0.0
    %87 = vmatpush1.msra.mxu0 %v52
    %88 = vmatprep.subr.mxu0 0.0
    %89 = vmatpush1.msra.mxu0 %v51
    %90 = vmatprep.subr.mxu0 0.0
    %91 = vmatpush1.msra.mxu0 %v50
    %92 = vmatprep.subr.mxu0 0.0
    %93 = vmatpush1.msra.mxu0 %v49
    %94 = vmatprep.subr.mxu0 0.0
    %95 = vmatpush1.msra.mxu0 %v48
    %96 = vmatprep.subr.mxu0 0.0
    %97 = vmatpush2.msra.mxu0 0.0
    %98 = vmatprep.subr.mxu0 0.0
    %99 = vmatpush2.msra.mxu0 0.0
    %100 = vmatprep.subr.mxu0 0.0
    %101 = vmatpush2.msra.mxu0 0.0
    %102 = vmatprep.subr.mxu0 0.0
    %103 = vmatpush2.msra.mxu0 0.0
    %104 = vmatprep.subr.mxu0 0.0
    %105 = vmatpush2.msra.mxu0 0.0
    %106 = vmatprep.subr.mxu0 0.0
    %107 = vmatpush2.msra.mxu0 0.0
    %108 = vmatprep.subr.mxu0 0.0
    %109 = vmatpush2.msra.mxu0 0.0
    %110 = vmatprep.subr.mxu0 0.0
    %111 = vmatpush2.msra.mxu0 0.0
    %112 = vmatprep.subr.mxu0 0.0
    %113 = vmatpush2.msra.mxu0 0.0
    %114 = vmatprep.subr.mxu0 0.0
    %115 = vmatpush2.msra.mxu0 0.0
    %116 = vmatprep.subr.mxu0 0.0
    %117 = vmatpush2.msra.mxu0 0.0
    %118 = vmatprep.subr.mxu0 0.0
    %119 = vmatpush2.msra.mxu0 0.0
    %120 = vmatprep.subr.mxu0 0.0
    %121 = vmatpush2.msra.mxu0 0.0
    %122 = vmatprep.subr.mxu0 0.0
    %123 = vmatpush2.msra.mxu0 0.0
    %124 = vmatprep.subr.mxu0 0.0
    %125 = vmatpush2.msra.mxu0 0.0
    %126 = vmatprep.subr.mxu0 0.0
    %127 = vmatpush2.msra.mxu0 0.0
    %128 = vmatprep.mubr.f32.mxu0 0.0
    %129 = vmatmul.mubr.f32.gmra.mxu0 %v47
    %v130 = vpop.f32.mrf.mxu0
    %v131 = vadd.f32 0.0, %v130
    %v132 = vpop.f32.mrf.mxu0
    %133 = vdwg.mxu0
    %v134 = vld [vmem:[%s2] sm:$0xff]
    %v135 = vlaneseq
    %v136 = vand.u32 %v135, 127
    %s137 = smul.u32 0, 128
    %v138 = vstv %s137
    %v139 = vadd.s32 %v136, %v138
    %140 = vset.pattern.permute.xlu0 0
    %141 = vperm.xlu0 %140, %v134
    %v142 = vpop.permute.xlu0 %141
    %vm143 = vcmp.eq.s32.totalorder %v139, %v142
    %vm144 = vcmp.ge.s32.totalorder %v134, 0
    %vm145 = vmxor %vm143, 1
    %v146 = vsel %vm144, 1, 0
    %147 = vset.pattern.permute.xlu0 0
    %148 = vperm.xlu0 %147, %v146
    %v149 = vpop.permute.xlu0 %148
    %vm150 = vcmp.eq.s32.totalorder %v149, 1
    %vm151 = vmand %vm145, %vm150
    %v152 = vmul.f32 %v131, -32.0
    %v153 = vmul.f32 %v152, 1.442695
    %v154 = vpow.pop %v153
    %v155 = vmul.f32 %v154, 24.53253
    %v156 = vrcp.pop %v154
    %v157 = vmul.f32 1.0, %v156
    %v158 = vmul.f32 %v157, 24.53253
    %v159 = vld [vmem:[#allocation2] sm:$0x1]
    %v160 = vsel %vm143, %v155, 0.0
    %v161 = vrot.slane %v160, 4
    %v162 = vadd.f32 %v160, %v161
    %v163 = vrot.slane %v162, 2
    %v164 = vadd.f32 %v162, %v163
    %v165 = vrot.slane %v164, 1
    %v166 = vadd.f32 %v164, %v165
    %v167 = vadd.f32 %v159, %v166
    %168 = vst [vmem:[#allocation2] sm:$0x1] %v167
    %v169 = vld [vmem:[#allocation3] sm:$0x1]
    %v170 = vsel %vm151, %v158, 0.0
    %v171 = vrot.slane %v170, 4
    %v172 = vadd.f32 %v170, %v171
    %v173 = vrot.slane %v172, 2
    %v174 = vadd.f32 %v172, %v173
    %v175 = vrot.slane %v174, 1
    %v176 = vadd.f32 %v174, %v175
    %v177 = vadd.f32 %v169, %v176
    %178 = vst [vmem:[#allocation3] sm:$0x1] %v177
    // Predicated region
    $region26: #{tpu_custom_call.1} parent=1 // pred_check
      %p179 = pneg %p35
    $region27: #{tpu_custom_call.1} parent=1 // pred_check_branch
      %181 = sbr.rel (%p179) target = $region29
    $region28: #{tpu_custom_call.1} parent=1 // pred_region
      %v182 = vld [vmem:[%s3] sm:$0x1]
      %v183 = vld [vmem:[#allocation2] sm:$0x1]
      %v184 = vmul.f32 %v182, %v183
      %v185 = vadd.f32 %v184, 1.0
      %v186 = vlog2.pop %v185
      %v187 = vmul.f32 %v186, 0.6931472
      %188 = vst [vmem:[#allocation7] sm:$0x1] %v187
      %v189 = vld [vmem:[#allocation3] sm:$0x1]
      %v190 = vmul.f32 %v182, %v189
      %v191 = vadd.f32 %v190, 1.0
      %v192 = vlog2.pop %v191
      %v193 = vmul.f32 %v192, 0.6931472
      %194 = vst [vmem:[#allocation8] sm:$0x1] %v193
    $region29: #{tpu_custom_call.1} parent=1 // pred_fallthru
      _
    // Predicated region
    $region30: #{tpu_custom_call.1} parent=1 // pred_check
      _
    $region31: #{tpu_custom_call.1} parent=1 // pred_check_branch
      %196 = sbr.rel (0) target = $region33
    $region32: #{tpu_custom_call.1} parent=1 // pred_region
      %s198 = ssub.s32 16, 16
      %199 = vsyncadd [#allocation6], %s198
      %s201 = sshll.u32 [#allocation7], 4
      %s202 = int_to_ptr.vmem [resolvable:$true] %s201
      %204 = dma.vmem_to_hbm [thread:$0]  %s202, 16, %s4, [#allocation6]
    $region33: #{tpu_custom_call.1} parent=1 // pred_fallthru
      _
    // Predicated region
    $region34: #{tpu_custom_call.1} parent=1 // pred_check
      _
    $region35: #{tpu_custom_call.1} parent=1 // pred_check_branch
      %206 = sbr.rel (0) target = $region37
    $region36: #{tpu_custom_call.1} parent=1 // pred_region
      %s208 = ssub.s32 16, 16
      %209 = vsyncadd [#allocation9], %s208
      %s211 = sshll.u32 [#allocation8], 4
      %s212 = int_to_ptr.vmem [resolvable:$true] %s211
      %214 = dma.vmem_to_hbm [thread:$0]  %s212, 16, %s5, [#allocation9]
    $region37: #{tpu_custom_call.1} parent=1 // pred_fallthru
      _
    // Predicated region
    $region38: #{tpu_custom_call.1} parent=1 // pred_check
      _
    $region39: #{tpu_custom_call.1} parent=1 // pred_check_branch
      %216 = sbr.rel (0) target = $region41
    $region40: #{tpu_custom_call.1} parent=1 // pred_region
      %217 = dma.done [#allocation6], 16
    $region41: #{tpu_custom_call.1} parent=1 // pred_fallthru
      _
    // Predicated region
    $region42: #{tpu_custom_call.1} parent=1 // pred_check
      _
    $region43: #{tpu_custom_call.1} parent=1 // pred_check_branch
      %219 = sbr.rel (0) target = $region45
    $region44: #{tpu_custom_call.1} parent=1 // pred_region
      %220 = dma.done [#allocation9], 16
    $region45: #{tpu_custom_call.1} parent=1 // pred_fallthru
      _
    %221 = vsyncpa [#allocation5], 1
    %222 = vsyncpa [#allocation6], 1
    %223 = vsyncpa [#allocation9], 1

</llo_original>
